<compile_context>
chip_gen: v5e
topology: v5e:2x2
jax: 0.10.0
libtpu: 0.0.40
codegen_flags: <defaults>
</compile_context>

<pallas_src>
import functools

import jax
import jax.numpy as jnp
from jax.experimental import pallas as pl
from jax.experimental.pallas import tpu as pltpu

SEARCH_RANGE = 4
DIM_CORR = (SEARCH_RANGE * 2 + 1) ** 2          # 81
NUM_CH_IN = DIM_CORR + 32 + 2 + 1               # 116
OUTPUT_LEVEL = 4
NUM_LEVELS = 7
NUM_CHS = [3, 16, 32, 64, 96, 128, 196]
DIV_FLOW = 0.05


def _default_vmem_limit():
    cap = 128 * 1024 * 1024
    try:
        info = pltpu.get_tpu_info()
        cap = int(getattr(info, "vmem_capacity_bytes", cap))
    except Exception:
        pass
    # 3/4 of physical VMEM, capped at 96 MiB (v5e/v6e: 96 MiB, v7x: 48 MiB).
    return min((cap * 3) // 4, 96 * 1024 * 1024)


_VMEM_LIMIT = _default_vmem_limit()
_SCRATCH_BUDGET = 10 * 1024 * 1024      # budget for each manual double-buffered DMA scratch


# --------------------------------------------------------------------------
# Kernel 1: plain tiled matmul + bias + LeakyReLU (1x1 convs, stride-2 im2col convs)
# --------------------------------------------------------------------------
def _matmul_kernel(x_ref, w_ref, b_ref, o_ref, *, leaky):
    acc = jnp.dot(x_ref[...].astype(jnp.bfloat16), w_ref[...],
                  preferred_element_type=jnp.float32)
    acc = acc + b_ref[...]
    if leaky:                                    # fused LeakyReLU(0.1), f32 epilogue
        acc = jnp.where(acc > 0, acc, 0.1 * acc)
    o_ref[...] = acc


def _matmul_call(x2d, w2d, b, leaky):
    M, K = x2d.shape
    N = w2d.shape[1]
    TM = 512
    if M < TM:
        TM = max(16, -(-M // 16) * 16)
    Mp = -(-M // TM) * TM
    if Mp != M:
        x2d = jnp.pad(x2d, ((0, Mp - M), (0, 0)))
    out = pl.pallas_call(
        functools.partial(_matmul_kernel, leaky=leaky),
        out_shape=jax.ShapeDtypeStruct((Mp, N), jnp.float32),
        grid_spec=pltpu.PrefetchScalarGridSpec(
            num_scalar_prefetch=0,
            grid=(Mp // TM,),
            in_specs=[pl.BlockSpec((TM, K), lambda i: (i, 0)),
                      pl.BlockSpec((K, N), lambda i: (0, 0)),
                      pl.BlockSpec((1, N), lambda i: (0, 0))],
            out_specs=pl.BlockSpec((TM, N), lambda i: (i, 0))),
        compiler_params=pltpu.CompilerParams(
            dimension_semantics=("parallel",),
            vmem_limit_bytes=_VMEM_LIMIT),
    )(x2d, w2d, b)
    return out[:M] if Mp != M else out


# --------------------------------------------------------------------------
# Kernel 2: fused 3x3 (any dilation), stride-1 conv as row-shifted matmuls.
#   Input is the padded activation flattened to rows of C channels; each of the k*k taps is a
#   constant row shift, so the kernel does k*k shifted (TM, C) x (C, Cout) bf16 matmuls from a
#   manually double-buffered VMEM window.  Bias + LeakyReLU fused.
# --------------------------------------------------------------------------
def _conv_rows_kernel(x_hbm, w_ref, b_ref, o_ref, xbuf, sem, *, offsets, tm, leaky):
    i = pl.program_id(0)
    nt = pl.num_programs(0)
    win = xbuf.shape[1]

    def _start(tile, slot):
        pltpu.make_async_copy(x_hbm.at[pl.ds(tile * tm, win), :],
                              xbuf.at[slot], sem.at[slot]).start()

    @pl.when(i == 0)
    def _():
        _start(0, 0)

    slot = i % 2

    @pl.when(i + 1 < nt)
    def _():
        _start(i + 1, 1 - slot)

    pltpu.make_async_copy(x_hbm.at[pl.ds(0, win), :],
                          xbuf.at[slot], sem.at[slot]).wait()

    xcur = xbuf.at[slot]
    cout = o_ref.shape[-1]
    acc = jnp.zeros((tm, cout), jnp.float32)
    for t, off in enumerate(offsets):
        lhs = xcur[off:off + tm, :].astype(jnp.bfloat16)
        acc = acc + jnp.dot(lhs, w_ref[t], preferred_element_type=jnp.float32)
    acc = acc + b_ref[...]
    if leaky:
        acc = jnp.where(acc > 0, acc, 0.1 * acc)
    o_ref[...] = acc


@functools.partial(jax.jit, static_argnames=("k", "dil", "leaky"))
def _conv3x3_s1(x, w3, b, *, k, dil, leaky):
    N, H, W, C = x.shape
    Cout = w3.shape[-1]
    pad = ((k - 1) * dil) // 2
    Hp, Wp = H + 2 * pad, W + 2 * pad
    P = pad * (Wp + 1)                    # flat-row halo (top & bottom)
    span = 2 * P
    Mi = N * Hp * Wp

    TM = 512
    if Mi < TM:
        TM = max(16, -(-Mi // 16) * 16)
    while TM > 64 and 2 * (TM + span) * C * 4 > _SCRATCH_BUDGET:
        TM -= 64
    nt = -(-Mi // TM)
    Mp = nt * TM

    xp = jnp.pad(x, ((0, 0), (pad, pad), (pad, pad), (0, 0)))
    xf = xp.reshape(Mi, C)
    xf = jnp.pad(xf, ((P, P + (Mp - Mi)), (0, 0)))
    offsets = tuple(ky * dil * Wp + kx * dil for ky in range(k) for kx in range(k))
    win = TM + span

    yf = pl.pallas_call(
        functools.partial(_conv_rows_kernel, offsets=offsets, tm=TM, leaky=leaky),
        out_shape=jax.ShapeDtypeStruct((Mp, Cout), jnp.float32),
        grid_spec=pltpu.PrefetchScalarGridSpec(
            num_scalar_prefetch=0,
            grid=(nt,),
            in_specs=[pl.BlockSpec(memory_space=pl.ANY),
                      pl.BlockSpec((k * k, C, Cout), lambda i: (0, 0, 0)),
                      pl.BlockSpec((1, Cout), lambda i: (0, 0))],
            out_specs=pl.BlockSpec((TM, Cout), lambda i: (i, 0)),
            scratch_shapes=[pltpu.VMEM((2, win, C), jnp.float32),
                            pltpu.SemaphoreType.DMA((2,))]),
        compiler_params=pltpu.CompilerParams(
            # manual cross-step double-buffering -> keep the grid sequential
            dimension_semantics=("arbitrary",),
            vmem_limit_bytes=_VMEM_LIMIT),
    )(xf, w3, b)

    y = yf[:Mi].reshape(N, Hp, Wp, Cout)
    return y[:, pad:pad + H, pad:pad + W, :]


# --------------------------------------------------------------------------
# Kernel 3: 81-channel cost volume (Correlation, max_disp=4) + fused LeakyReLU.
#   Row-tiled; x2 (padded) rows + 2R halo are fetched with a manually double-buffered DMA;
#   each shift's channel-reduced result is stored directly into its output lane.
# --------------------------------------------------------------------------
def _corr_kernel(x1_ref, x2_hbm, o_ref, x2buf, sem, *, radius, th):
    i = pl.program_id(0)
    nt = pl.num_programs(0)
    win = x2buf.shape[2]                  # th + 2*radius

    def _start(tile, slot):
        pltpu.make_async_copy(x2_hbm.at[:, pl.ds(tile * th, win), :, :],
                              x2buf.at[slot], sem.at[slot]).start()

    @pl.when(i == 0)
    def _():
        _start(0, 0)

    slot = i % 2

    @pl.when(i + 1 < nt)
    def _():
        _start(i + 1, 1 - slot)

    pltpu.make_async_copy(x2_hbm.at[:, pl.ds(0, win), :, :],
                          x2buf.at[slot], sem.at[slot]).wait()

    x1 = x1_ref[...]
    w = x1.shape[2]
    c = x1.shape[3]
    inv_c = 1.0 / c
    x2cur = x2buf.at[slot]
    d = 2 * radius + 1
    for dy in range(d):
        for dx in range(d):
            x2s = x2cur[:, dy:dy + th, dx:dx + w, :]
            prod = jnp.sum(x1 * x2s, axis=-1, keepdims=True) * inv_c
            idx = dy * d + dx
            o_ref[:, :, :, idx:idx + 1] = jnp.where(prod > 0, prod, 0.1 * prod)


@jax.jit
def correlation_leaky(x1, x2):
    """Cost volume, max displacement 4, kernel 1 (81 channels), + LeakyReLU(0.1)."""
    R = SEARCH_RANGE
    N, H, W, C = x1.shape
    per_row = N * (W + 2 * R) * C * 4
    if 2 * (H + 2 * R) * per_row <= _SCRATCH_BUDGET:
        TH, nt = H, 1
    else:
        TH = max(8, (min(H, 512) // 8) * 8)
        while TH > 8 and 2 * (TH + 2 * R) * per_row > _SCRATCH_BUDGET:
            TH -= 8
        nt = -(-H // TH)
    Hpad = nt * TH

    x1p = x1 if Hpad == H else jnp.pad(x1, ((0, 0), (0, Hpad - H), (0, 0), (0, 0)))
    x2p = jnp.pad(x2, ((0, 0), (R, R + (Hpad - H)), (R, R), (0, 0)))

    out = pl.pallas_call(
        functools.partial(_corr_kernel, radius=R, th=TH),
        out_shape=jax.ShapeDtypeStruct((N, Hpad, W, DIM_CORR), jnp.float32),
        grid_spec=pltpu.PrefetchScalarGridSpec(
            num_scalar_prefetch=0,
            grid=(nt,),
            in_specs=[pl.BlockSpec((N, TH, W, C), lambda i: (0, i, 0, 0)),
                      pl.BlockSpec(memory_space=pl.ANY)],
            out_specs=pl.BlockSpec((N, TH, W, DIM_CORR), lambda i: (0, i, 0, 0)),
            scratch_shapes=[pltpu.VMEM((2, N, TH + 2 * R, W + 2 * R, C), jnp.float32),
                            pltpu.SemaphoreType.DMA((2,))]),
        compiler_params=pltpu.CompilerParams(
            dimension_semantics=("arbitrary",),
            vmem_limit_bytes=_VMEM_LIMIT),
    )(x1p, x2p)
    return out if Hpad == H else out[:, :H]


# --------------------------------------------------------------------------
# Convolution dispatch (1x1 / 3x3-s1 fused / strided via im2col)
# --------------------------------------------------------------------------
def _im2col(x, ksize, stride, dilation):
    N, H, W, C = x.shape
    pad = ((ksize - 1) * dilation) // 2
    xp = jnp.pad(x, ((0, 0), (pad, pad), (pad, pad), (0, 0)))
    Hp, Wp = H + 2 * pad, W + 2 * pad
    Ho = (Hp - dilation * (ksize - 1) - 1) // stride + 1
    Wo = (Wp - dilation * (ksize - 1) - 1) // stride + 1
    cols = []
    for ky in range(ksize):
        for kx in range(ksize):
            y0 = ky * dilation
            x0 = kx * dilation
            patch = jax.lax.slice(
                xp, (0, y0, x0, 0),
                (N, y0 + stride * (Ho - 1) + 1, x0 + stride * (Wo - 1) + 1, C),
                (1, stride, stride, 1))
            cols.append(patch)
    return jnp.concatenate(cols, axis=-1), Ho, Wo


@functools.partial(jax.jit, static_argnames=("leaky",))
def _conv1x1(x, w3, b, *, leaky):
    N, H, W, C = x.shape
    Cout = w3.shape[-1]
    y2d = _matmul_call(x.reshape(N * H * W, C), w3.reshape(C, Cout), b, leaky)
    return y2d.reshape(N, H, W, Cout)


@functools.partial(jax.jit, static_argnames=("k", "stride", "dil", "leaky"))
def _conv_strided(x, w3, b, *, k, stride, dil, leaky):
    N = x.shape[0]
    Cout = w3.shape[-1]
    cols, Ho, Wo = _im2col(x.astype(jnp.bfloat16), k, stride, dil)
    x2d = cols.reshape(N * Ho * Wo, -1)
    y2d = _matmul_call(x2d, w3.reshape(-1, Cout), b, leaky)
    return y2d.reshape(N, Ho, Wo, Cout)


def conv_apply(p, x):
    k, s, d, relu = p["k"], p["s"], p["d"], p["relu"]
    if s == 1 and k == 1:
        return _conv1x1(x, p["w"], p["b"], leaky=relu)
    if s == 1:
        return _conv3x3_s1(x, p["w"], p["b"], k=k, dil=d, leaky=relu)
    return _conv_strided(x, p["w"], p["b"], k=k, stride=s, dil=d, leaky=relu)


# --------------------------------------------------------------------------
# Warping / resizing glue (data-dependent gathers stay in JAX)
# --------------------------------------------------------------------------
def _grid_sample_bilinear(x, gx, gy):
    # x: NHWC; gx/gy: normalized coords in [-1, 1]; zeros padding; align_corners=True
    # (matches the original repo's grid construction).
    N, H, W, C = x.shape
    ix = (gx + 1.0) * 0.5 * (W - 1)
    iy = (gy + 1.0) * 0.5 * (H - 1)
    x0 = jnp.floor(ix)
    y0 = jnp.floor(iy)
    flat = x.reshape(N, H * W, C)

    def gather(xi, yi):
        valid = ((xi >= 0) & (xi <= W - 1) & (yi >= 0) & (yi <= H - 1)).astype(x.dtype)
        xi_c = jnp.clip(xi, 0, W - 1).astype(jnp.int32)
        yi_c = jnp.clip(yi, 0, H - 1).astype(jnp.int32)
        idx = (yi_c * W + xi_c).reshape(N, H * W, 1)
        g = jnp.take_along_axis(flat, idx, axis=1).reshape(N, H, W, C)
        return g * valid[..., None]

    wx1 = ix - x0
    wy1 = iy - y0
    wx0 = 1.0 - wx1
    wy0 = 1.0 - wy1
    return (gather(x0, y0) * (wx0 * wy0)[..., None]
            + gather(x0 + 1, y0) * (wx1 * wy0)[..., None]
            + gather(x0, y0 + 1) * (wx0 * wy1)[..., None]
            + gather(x0 + 1, y0 + 1) * (wx1 * wy1)[..., None])


@functools.partial(jax.jit, static_argnames=("height_im", "width_im", "div_flow"))
def warp(x, flow, *, height_im, width_im, div_flow):
    # TODO(synk): grid_sample (dynamic gather) has no clean Pallas TPU equivalent; JAX glue.
    N, H, W, _ = x.shape
    flo_w = flow[..., 0] * 2.0 / max(width_im - 1, 1) / div_flow
    flo_h = flow[..., 1] * 2.0 / max(height_im - 1, 1) / div_flow
    base_x = jnp.broadcast_to(jnp.linspace(-1.0, 1.0, W)[None, None, :], (N, H, W))
    base_y = jnp.broadcast_to(jnp.linspace(-1.0, 1.0, H)[None, :, None], (N, H, W))
    gx = base_x + flo_w
    gy = base_y + flo_h
    x_warp = _grid_sample_bilinear(x, gx, gy)
    mask = _grid_sample_bilinear(jnp.ones_like(x), gx, gy)
    mask = (mask >= 0.999).astype(x.dtype)   # fp-robust valid-mask threshold
    return x_warp * mask


def _resize_bilinear(x, out_h, out_w):
    # bilinear, align_corners=True (matches upsample2d_as)
    N, H, W, C = x.shape
    if H == out_h and W == out_w:
        return x
    ys = jnp.linspace(0.0, H - 1.0, out_h) if out_h > 1 else jnp.zeros((1,), jnp.float32)
    xs = jnp.linspace(0.0, W - 1.0, out_w) if out_w > 1 else jnp.zeros((1,), jnp.float32)
    y0 = jnp.floor(ys).astype(jnp.int32)
    x0 = jnp.floor(xs).astype(jnp.int32)
    y1 = jnp.minimum(y0 + 1, H - 1)
    x1 = jnp.minimum(x0 + 1, W - 1)
    wy = (ys - y0.astype(jnp.float32))[None, :, None, None]
    wx = (xs - x0.astype(jnp.float32))[None, None, :, None]
    top = x[:, y0, :, :]
    bot = x[:, y1, :, :]
    rows = top * (1.0 - wy) + bot * wy
    left = rows[:, :, x0, :]
    right = rows[:, :, x1, :]
    return left * (1.0 - wx) + right * wx


@jax.jit
def upsample2d_as(x, target):
    return _resize_bilinear(x, target.shape[1], target.shape[2])


def rescale_flow(flow, div_flow, width_im, height_im, to_local):
    fh, fw = flow.shape[1], flow.shape[2]
    if to_local:
        u_scale = float(fw) / width_im / div_flow
        v_scale = float(fh) / height_im / div_flow
    else:
        u_scale = width_im * div_flow / float(fw)
        v_scale = height_im * div_flow / float(fh)
    return jnp.concatenate([flow[..., 0:1] * u_scale,
                            flow[..., 1:2] * v_scale], axis=-1)


# --------------------------------------------------------------------------
# Parameters (deterministic MSRA-style init; no checkpoint load)
# --------------------------------------------------------------------------
class _ParamFactory:
    def __init__(self, seed):
        self._key = jax.random.PRNGKey(seed)

    def conv(self, cin, cout, ksize=3, stride=1, dilation=1, relu=True):
        self._key, sub = jax.random.split(self._key)
        fan_in = cin * ksize * ksize
        w = jax.random.normal(sub, (ksize, ksize, cin, cout), jnp.float32)
        w = w * jnp.sqrt(2.0 / fan_in)
        return {"w": w.reshape(ksize * ksize, cin, cout).astype(jnp.bfloat16),
                "b": jnp.zeros((1, cout), jnp.float32),
                "k": ksize, "s": stride, "d": dilation, "relu": relu}


def _fuse_heads(a, b):
    # flow (Cout=2) + occ (Cout=1) share the input -> one Cout=3 conv, split after.
    assert a["k"] == b["k"] and a["s"] == b["s"] and a["d"] == b["d"]
    return {"w": jnp.concatenate([a["w"], b["w"]], axis=-1),
            "b": jnp.concatenate([a["b"], b["b"]], axis=-1),
            "k": a["k"], "s": a["s"], "d": a["d"], "relu": False}


def init_params(seed=0):
    pf = _ParamFactory(seed)
    fpe = []
    for cin, cout in zip(NUM_CHS[:-1], NUM_CHS[1:]):
        fpe.append((pf.conv(cin, cout, 3, 2, 1), pf.conv(cout, cout, 3, 1, 1)))
    conv_1x1 = [pf.conv(196, 32, 1, 1, 1), pf.conv(128, 32, 1, 1, 1),
                pf.conv(96, 32, 1, 1, 1), pf.conv(64, 32, 1, 1, 1)]
    conv_1x1_1 = pf.conv(16, 3, 1, 1, 1)
    ch_est = 2 * NUM_CH_IN                            # 232
    est = dict(conv1=pf.conv(ch_est, 128), conv2=pf.conv(ch_est + 128, 128),
               conv3=pf.conv(ch_est + 256, 96), conv4=pf.conv(ch_est + 352, 64),
               conv5=pf.conv(ch_est + 416, 32),
               flowocc=_fuse_heads(pf.conv(ch_est + 448, 2, relu=False),
                                   pf.conv(ch_est + 448, 1, relu=False)))
    ch_ctx = ch_est + 448 + 2 + 1                     # 683
    ctx = dict(convs=[pf.conv(ch_ctx, 128, 3, 1, 1), pf.conv(128, 128, 3, 1, 2),
                      pf.conv(128, 128, 3, 1, 4), pf.conv(128, 96, 3, 1, 8),
                      pf.conv(96, 64, 3, 1, 16), pf.conv(64, 32, 3, 1, 1)],
               flowocc=_fuse_heads(pf.conv(32, 2, relu=False),
                                   pf.conv(32, 1, relu=False)))
    conv_1x1_time = pf.conv(ch_est + 448, NUM_CH_IN, 1, 1, 1)
    rflow = dict(convs=[pf.conv(2 + 1 + 32, 128), pf.conv(128, 64), pf.conv(64, 32)],
                 last=pf.conv(32, 2, relu=False))
    rocc = dict(convs=[pf.conv(1 + 32 + 32, 128), pf.conv(128, 64), pf.conv(64, 32)],
                last=pf.conv(32, 1, relu=False))
    occup = dict(convs=[pf.conv(11, 32), pf.conv(32, 16)],
                 last=pf.conv(16, 1, relu=False))
    return dict(fpe=fpe, conv_1x1=conv_1x1, conv_1x1_1=conv_1x1_1,
                conv_1x1_time=conv_1x1_time, est=est, ctx=ctx,
                rflow=rflow, rocc=rocc, occup=occup)


# --------------------------------------------------------------------------
# Sub-networks
# --------------------------------------------------------------------------
def feature_extractor(p_fpe, x):
    pyr = []
    for c1, c2 in p_fpe:
        x = conv_apply(c1, x)
        x = conv_apply(c2, x)
        pyr.append(x)
    return pyr[::-1]


def flow_occ_estimator(p, x):
    x1 = jnp.concatenate([conv_apply(p["conv1"], x), x], -1)
    x2 = jnp.concatenate([conv_apply(p["conv2"], x1), x1], -1)
    x3 = jnp.concatenate([conv_apply(p["conv3"], x2), x2], -1)
    x4 = jnp.concatenate([conv_apply(p["conv4"], x3), x3], -1)
    x5 = jnp.concatenate([conv_apply(p["conv5"], x4), x4], -1)
    fo = conv_apply(p["flowocc"], x5)                 # fused flow(2)+occ(1) head
    return x5, fo[..., 0:2], fo[..., 2:3]


def context_network(p, x):
    for c in p["convs"]:
        x = conv_apply(c, x)
    fo = conv_apply(p["flowocc"], x)
    return fo[..., 0:2], fo[..., 2:3]


def refine_flow(p, flow, img_diff, feat):
    # TODO(synk): RefineFlow internals not shown upstream; reconstructed as residual conv
    # stack over [flow, ||img_diff||_2, feat] (matches the 2+1+32 ch_in).
    diff_norm = jnp.sqrt(jnp.sum(img_diff * img_diff, axis=-1, keepdims=True))
    x = jnp.concatenate([flow, diff_norm, feat], -1)
    for c in p["convs"]:
        x = conv_apply(c, x)
    return flow + conv_apply(p["last"], x)


def refine_occ(p, occ, feat1, feat2):
    # TODO(synk): RefineOcc internals reconstructed (residual conv stack, 65 ch_in).
    x = jnp.concatenate([occ, feat1, feat2], -1)
    for c in p["convs"]:
        x = conv_apply(c, x)
    return occ + conv_apply(p["last"], x)


def occ_upsample(p, occ, feat):
    # TODO(synk): OccUpsampleNetwork internals reconstructed: occ bilinearly upsampled to the
    # feature resolution, residual conv stack over the 11-channel concat.
    occ_up = upsample2d_as(occ, feat)
    x = jnp.concatenate([occ_up, feat], -1)
    for c in p["convs"]:
        x = conv_apply(c, x)
    return occ_up + conv_apply(p["last"], x)


# --------------------------------------------------------------------------
# StarFlow forward (training=True path, 2-frame input)
# --------------------------------------------------------------------------
def starflow_forward(params, list_imgs_nchw, div_flow=DIV_FLOW):
    assert len(list_imgs_nchw) == 2, "this implementation covers the 2-frame path"
    list_imgs = [jnp.transpose(im, (0, 2, 3, 1)).astype(jnp.float32)
                 for im in list_imgs_nchw]
    height_im, width_im = list_imgs[0].shape[1], list_imgs[0].shape[2]

    list_pyramids = [feature_extractor(params["fpe"], im) + [im] for im in list_imgs]
    num_scales = len(list_pyramids[0])

    flows_f = [[] for _ in range(num_scales)]
    flows_b = [[] for _ in range(num_scales)]
    occs_f = [[] for _ in range(num_scales)]
    occs_b = [[] for _ in range(num_scales)]
    flows_coarse_f = [[] for _ in range(OUTPUT_LEVEL + 1)]
    occs_coarse_f = [[] for _ in range(OUTPUT_LEVEL + 1)]

    b_size, h_x1, w_x1, _ = list_pyramids[0][0].shape
    flow_f = jnp.zeros((b_size, h_x1, w_x1, 2), jnp.float32)
    flow_b = jnp.zeros((b_size, h_x1, w_x1, 2), jnp.float32)
    occ_f = jnp.zeros((b_size, h_x1, w_x1, 1), jnp.float32)
    occ_b = jnp.zeros((b_size, h_x1, w_x1, 1), jnp.float32)
    previous_features = []

    wrp = functools.partial(warp, height_im=height_im, width_im=width_im,
                            div_flow=div_flow)

    for image_index in range(len(list_imgs) - 1):
        x1_pyr = list_pyramids[image_index]
        x2_pyr = list_pyramids[image_index + 1]
        for l, (x1, x2) in enumerate(zip(x1_pyr, x2_pyr)):
            n = x1.shape[0]
            if l <= OUTPUT_LEVEL:
                if image_index == 0:
                    bs_, h_, w_, _ = list_pyramids[0][l].shape
                    previous_features.append(
                        jnp.zeros((bs_, h_, w_, NUM_CH_IN), jnp.float32))
                if l == 0:
                    x2_warp, x1_warp = x2, x1
                else:
                    flow_f = upsample2d_as(flow_f, x1)
                    flow_b = upsample2d_as(flow_b, x2)
                    occ_f = upsample2d_as(occ_f, x1)
                    occ_b = upsample2d_as(occ_b, x2)
                    wpair = wrp(jnp.concatenate([x2, x1], 0),
                                jnp.concatenate([flow_f, flow_b], 0))
                    x2_warp, x1_warp = wpair[:n], wpair[n:]

                # batched fwd/bwd cost volume
                corr = correlation_leaky(jnp.concatenate([x1, x2], 0),
                                         jnp.concatenate([x2_warp, x1_warp], 0))
                out_corr_relu_f, out_corr_relu_b = corr[:n], corr[n:]

                if l != OUTPUT_LEVEL:
                    both = conv_apply(params["conv_1x1"][l],
                                      jnp.concatenate([x1, x2], 0))
                    x1_1by1, x2_1by1 = both[:n], both[n:]
                else:
                    x1_1by1, x2_1by1 = x1, x2

                if image_index > 0:
                    previous_features[l] = wrp(previous_features[l], flows_b[l][-1])

                flow_f = rescale_flow(flow_f, div_flow, width_im, height_im, True)
                flow_b = rescale_flow(flow_b, div_flow, width_im, height_im, True)

                features = jnp.concatenate(
                    [previous_features[l], out_corr_relu_f, x1_1by1, flow_f, occ_f], -1)
                features_b = jnp.concatenate(
                    [jnp.zeros_like(previous_features[l]), out_corr_relu_b,
                     x2_1by1, flow_b, occ_b], -1)

                # batched fwd/bwd estimator (shared weights) + fused flow/occ head
                x_intm, flow_res, occ_res = flow_occ_estimator(
                    params["est"], jnp.concatenate([features, features_b], 0))
                x_intm_f, x_intm_b = x_intm[:n], x_intm[n:]
                flow_est_f = flow_f + flow_res[:n]
                flow_est_b = flow_b + flow_res[n:]
                occ_est_f = occ_f + occ_res[:n]
                occ_est_b = occ_b + occ_res[n:]

                ctx_in = jnp.concatenate(
                    [jnp.concatenate([x_intm_f, flow_est_f, occ_est_f], -1),
                     jnp.concatenate([x_intm_b, flow_est_b, occ_est_b], -1)], 0)
                flow_cont_res, occ_cont_res = context_network(params["ctx"], ctx_in)
                flow_cont_f = flow_est_f + flow_cont_res[:n]
                flow_cont_b = flow_est_b + flow_cont_res[n:]
                occ_cont_f = occ_est_f + occ_cont_res[:n]
                occ_cont_b = occ_est_b + occ_cont_res[n:]

                img1_resize = upsample2d_as(list_imgs[image_index], flow_f)
                img2_resize = upsample2d_as(list_imgs[image_index + 1], flow_b)
                wimgs = wrp(
                    jnp.concatenate([img2_resize, img1_resize], 0),
                    jnp.concatenate(
                        [rescale_flow(flow_cont_f, div_flow, width_im, height_im, False),
                         rescale_flow(flow_cont_b, div_flow, width_im, height_im, False)], 0))
                img2_warp, img1_warp = wimgs[:n], wimgs[n:]

                flow_ref = refine_flow(
                    params["rflow"],
                    jnp.concatenate([flow_cont_f, flow_cont_b], 0),
                    jnp.concatenate([img1_resize - img2_warp,
                                     img2_resize - img1_warp], 0),
                    jnp.concatenate([x1_1by1, x2_1by1], 0))
                flow_f, flow_b = flow_ref[:n], flow_ref[n:]

                flow_cont_f = rescale_flow(flow_cont_f, div_flow, width_im, height_im, False)
                flow_cont_b = rescale_flow(flow_cont_b, div_flow, width_im, height_im, False)
                flow_f = rescale_flow(flow_f, div_flow, width_im, height_im, False)
                flow_b = rescale_flow(flow_b, div_flow, width_im, height_im, False)

                w1by1 = wrp(jnp.concatenate([x2_1by1, x1_1by1], 0),
                            jnp.concatenate([flow_f, flow_b], 0))
                x2_1by1_warp, x1_1by1_warp = w1by1[:n], w1by1[n:]

                occ_ref = refine_occ(
                    params["rocc"],
                    jnp.concatenate([occ_cont_f, occ_cont_b], 0),
                    jnp.concatenate([x1_1by1, x2_1by1], 0),
                    jnp.concatenate([x1_1by1 - x2_1by1_warp,
                                     x2_1by1 - x1_1by1_warp], 0))
                occ_f, occ_b = occ_ref[:n], occ_ref[n:]

                previous_features[l] = conv_apply(params["conv_1x1_time"], x_intm_f)

                flows_f[l].append(flow_f)
                occs_f[l].append(occ_f)
                flows_b[l].append(flow_b)
                occs_b[l].append(occ_b)
                flows_coarse_f[l].append(flow_cont_f)
                occs_coarse_f[l].append(occ_cont_f)
            else:
                flow_f = upsample2d_as(flow_f, x1)
                flow_b = upsample2d_as(flow_b, x2)
                flows_f[l].append(flow_f)
                flows_b[l].append(flow_b)
                wfeat = wrp(jnp.concatenate([x2, x1], 0),
                            jnp.concatenate([flow_f, flow_b], 0))
                x2_warp, x1_warp = wfeat[:n], wfeat[n:]
                wflow = wrp(jnp.concatenate([flow_b, flow_f], 0),
                            jnp.concatenate([flow_f, flow_b], 0))
                flow_b_warp, flow_f_warp = wflow[:n], wflow[n:]
                if l != NUM_LEVELS - 1:
                    four = conv_apply(params["conv_1x1_1"],
                                      jnp.concatenate([x1, x2, x1_warp, x2_warp], 0))
                    x1_in, x2_in = four[:n], four[n:2 * n]
                    x1_w_in, x2_w_in = four[2 * n:3 * n], four[3 * n:]
                else:
                    x1_in, x2_in, x1_w_in, x2_w_in = x1, x2, x1_warp, x2_warp
                feats = jnp.concatenate(
                    [jnp.concatenate([x1_in, x2_w_in, flow_f, flow_b_warp], -1),
                     jnp.concatenate([x2_in, x1_w_in, flow_b, flow_f_warp], -1)], 0)
                occ_pair = occ_upsample(params["occup"],
                                        jnp.concatenate([occ_f, occ_b], 0), feats)
                occ_f, occ_b = occ_pair[:n], occ_pair[n:]
                occs_f[l].append(occ_f)
                occs_b[l].append(occ_b)

        flow_f = jnp.zeros((b_size, h_x1, w_x1, 2), jnp.float32)
        flow_b = jnp.zeros((b_size, h_x1, w_x1, 2), jnp.float32)
        occ_f = jnp.zeros((b_size, h_x1, w_x1, 1), jnp.float32)
        occ_b = jnp.zeros((b_size, h_x1, w_x1, 1), jnp.float32)

    # training output path (2 frames -> unwrap the single entry), back to NCHW
    to_nchw = lambda t: jnp.transpose(t, (0, 3, 1, 2))
    return {
        "flow": [to_nchw(f[0]) for f in flows_f],
        "occ": [to_nchw(o[0]) for o in occs_f],
        "flow_coarse": [to_nchw(f[0]) for f in flows_coarse_f],
        "occ_coarse": [to_nchw(o[0]) for o in occs_coarse_f],
    }


# --------------------------------------------------------------------------
if __name__ == "__main__":
    key = jax.random.PRNGKey(0)
    k1, k2 = jax.random.split(key)
    # NCHW images (batch=1, 3 channels, 64x64 so all 6 stride-2 pyramid levels exist)
    img1 = jax.random.normal(k1, (1, 3, 64, 64), jnp.float32)
    img2 = jax.random.normal(k2, (1, 3, 64, 64), jnp.float32)

    params = init_params(seed=0)
    out = starflow_forward(params, [img1, img2])

    for leaf in jax.tree_util.tree_leaves(out):
        jax.block_until_ready(leaf)
    print("KERNEL_OK")
</pallas_src>

<mosaic_0001>
module attributes {stable_mosaic.version = 11 : i64} {
  func.func @_matmul_kernel(%arg0: i32, %arg1: memref<512x27xbf16, #tpu.memory_space<vmem>>, %arg2: memref<27x16xbf16, #tpu.memory_space<vmem>>, %arg3: memref<1x16xf32, #tpu.memory_space<vmem>>, %arg4: memref<512x16xf32, #tpu.memory_space<vmem>>) attributes {dimension_semantics = [#tpu.dimension_semantics<parallel>], iteration_bounds = array<i64: 2>, scalar_prefetch = 0 : i64, scratch_operands = 0 : i64, tpu.core_type = #tpu.core_type<tc>, window_params = [{transform_indices = @transform_0, window_bounds = array<i64: 512, 27>}, {pipeline_mode = #tpu.pipeline_mode<synchronous>, transform_indices = @transform_1, window_bounds = array<i64: 27, 16>}, {pipeline_mode = #tpu.pipeline_mode<synchronous>, transform_indices = @transform_2, window_bounds = array<i64: 1, 16>}, {transform_indices = @transform_3, window_bounds = array<i64: 512, 16>}]} {
    %c0 = arith.constant 0 : index
    %c0_0 = arith.constant 0 : index
    %0 = vector.load %arg1[%c0, %c0_0] : memref<512x27xbf16, #tpu.memory_space<vmem>>, vector<512x27xbf16>
    %c0_1 = arith.constant 0 : index
    %c0_2 = arith.constant 0 : index
    %1 = vector.load %arg2[%c0_1, %c0_2] : memref<27x16xbf16, #tpu.memory_space<vmem>>, vector<27x16xbf16>
    %cst = arith.constant dense<0.000000e+00> : vector<512x16xf32>
    %2 = tpu.matmul %0, %1, %cst {dimension_numbers = #tpu.dot_dimension_numbers<[1], [0], [0], [1], [0, 0, 1, 1], [], []>} : vector<512x27xbf16>, vector<27x16xbf16>, vector<512x16xf32> -> vector<512x16xf32>
    %c0_3 = arith.constant 0 : index
    %c0_4 = arith.constant 0 : index
    %3 = vector.load %arg3[%c0_3, %c0_4] : memref<1x16xf32, #tpu.memory_space<vmem>>, vector<1x16xf32>
    %4 = vector.broadcast %3 : vector<1x16xf32> to vector<512x16xf32>
    %5 = arith.addf %2, %4 : vector<512x16xf32>
    %cst_5 = arith.constant 0.000000e+00 : f32
    %6 = vector.broadcast %cst_5 : f32 to vector<512x16xf32>
    %7 = arith.cmpf ogt, %5, %6 : vector<512x16xf32>
    %cst_6 = arith.constant 1.000000e-01 : f32
    %8 = vector.broadcast %cst_6 : f32 to vector<512x16xf32>
    %9 = arith.mulf %8, %5 : vector<512x16xf32>
    %10 = arith.select %7, %5, %9 : vector<512x16xi1>, vector<512x16xf32>
    %c0_7 = arith.constant 0 : index
    %c0_8 = arith.constant 0 : index
    %11 = vector.load %arg4[%c0_7, %c0_8] : memref<512x16xf32, #tpu.memory_space<vmem>>, vector<512x16xf32>
    tpu.vector_store %arg4[%c0_7, %c0_8], %10 {strides = array<i32>} : memref<512x16xf32, #tpu.memory_space<vmem>>, vector<512x16xf32>,
    return
  }
  func.func @transform_0(%arg0: i32) -> (i32, i32) {
    %c0_i32 = arith.constant 0 : i32
    %c0_i32_0 = arith.constant 0 : i32
    return %arg0, %c0_i32 : i32, i32
  }
  func.func @transform_1(%arg0: i32) -> (i32, i32) {
    %c0_i32 = arith.constant 0 : i32
    %c0_i32_0 = arith.constant 0 : i32
    %c0_i32_1 = arith.constant 0 : i32
    return %c0_i32, %c0_i32_0 : i32, i32
  }
  func.func @transform_2(%arg0: i32) -> (i32, i32) {
    %c0_i32 = arith.constant 0 : i32
    %c0_i32_0 = arith.constant 0 : i32
    %c0_i32_1 = arith.constant 0 : i32
    return %c0_i32, %c0_i32_0 : i32, i32
  }
  func.func @transform_3(%arg0: i32) -> (i32, i32) {
    %c0_i32 = arith.constant 0 : i32
    %c0_i32_0 = arith.constant 0 : i32
    return %arg0, %c0_i32 : i32, i32
  }
}

</mosaic_0001>

<llo_original>
// kernel: _conv_strided.1
$region0: #{_conv_strided.1}
  #allocation0 [shape = 'u32[]', space=smem, size = 0x4, offset = 0x4, fixed_abs, tag = 'smem constant byte address 0x4 - core index']
  #allocation1 [shape = 'u32[72,128]{1,0:T(1,128)}', space=vmem, size = 0x9000, scoped, tag = 'internal scratch']
  %s0 = inlined_call_operand.vmem [shape: bf16[1024,27], index: 0, kind: input, shape index: {}]
  %s1 = inlined_call_operand.vmem [shape: bf16[27,16], index: 1, kind: input, shape index: {}]
  %s2 = inlined_call_operand.vmem [shape: f32[1,16], index: 2, kind: input, shape index: {}]
  %s3 = inlined_call_operand.vmem [shape: f32[1024,16], index: 3, kind: output, shape index: {}]
  %s4 = sld [smem:[#allocation0]]
  $region45: #{_conv_strided.1} parent=0
    _
  %s6 = ssub.s32 1, %s4
  %s7 = scalar_select 0, %s6, %s4
  loop: start=0, step=1, limit=4
  $region2: #{_conv_strided.1} parent=0 // loop_pre_header
    _
  $region3: #{_conv_strided.1} parent=0 // loop_header
    %s9 = sphi 0, %s13
    %p10 = scmp.ge.s32.totalorder %s9, 4
    %s19 = sphi 0, %s21
    %s22 = sphi 0, %s19
    %s23 = sphi 0, %s22
    %s39 = sphi 0, %s23
    %s43 = sphi 0, %s43
    %s45 = sphi 0, %s43
    %s46 = sphi 0, %s45
    %s60 = sphi 0, %s46
    %s64 = sphi 0, %s64
    %s66 = sphi 0, %s64
    %s67 = sphi 0, %s66
    %s81 = sphi 0, %s67
    %s87 = sphi 0, %s89
    %s90 = sphi 0, %s87
    %s91 = sphi 0, %s90
    %s107 = sphi 0, %s91
  $region4: #{_conv_strided.1} parent=0 // loop_header_branch
    %12 = sbr.rel (%p10) target = $region8
  $region5: #{_conv_strided.1} parent=0 // loop_body
    %s14 = ssub.s32 %s9, 1
    %s15 = ssub.s32 %s9, 2
    %s16 = sadd.s32 %s9, 1
    %s17 = ssub.s32 %s9, %s16
    %p18 = scmp.eq.s32.totalorder %s17, 0
    %s20 = sadd.s32 %s19, 1
    %s21 = scalar_select %p18, %s19, %s20
    %p24 = pneg %p18
    %p25 = scmp.eq.s32.totalorder %s9, 1
    %p26 = por %p24, %p25
    %p27 = scmp.ne.s32.totalorder %s19, %s22
    %p28 = scmp.eq.s32.totalorder %s9, 0
    %p29 = por %p27, %p28
    %p30 = scmp.ne.s32.totalorder %s19, %s22
    %p31 = scmp.eq.s32.totalorder %s14, 1
    %p32 = por %p30, %p31
    %p33 = scmp.ne.s32.totalorder %s22, %s23
    %p34 = scmp.eq.s32.totalorder %s14, 0
    %p35 = por %p33, %p34
    %p36 = scmp.ne.s32.totalorder %s22, %s23
    %p37 = scmp.eq.s32.totalorder %s15, 1
    %p38 = por %p36, %p37
    %p40 = scmp.ne.s32.totalorder %s23, %s39
    %p41 = scmp.eq.s32.totalorder %s15, 0
    %p42 = por %p40, %p41
    %s44 = sadd.s32 %s43, 1
    %p47 = scmp.eq.s32.totalorder %s9, 1
    %p48 = scmp.ne.s32.totalorder %s43, %s45
    %p49 = scmp.eq.s32.totalorder %s9, 0
    %p50 = por %p48, %p49
    %p51 = scmp.ne.s32.totalorder %s43, %s45
    %p52 = scmp.eq.s32.totalorder %s14, 1
    %p53 = por %p51, %p52
    %p54 = scmp.ne.s32.totalorder %s45, %s46
    %p55 = scmp.eq.s32.totalorder %s14, 0
    %p56 = por %p54, %p55
    %p57 = scmp.ne.s32.totalorder %s45, %s46
    %p58 = scmp.eq.s32.totalorder %s15, 1
    %p59 = por %p57, %p58
    %p61 = scmp.ne.s32.totalorder %s46, %s60
    %p62 = scmp.eq.s32.totalorder %s15, 0
    %p63 = por %p61, %p62
    %s65 = sadd.s32 %s64, 1
    %p68 = scmp.eq.s32.totalorder %s9, 1
    %p69 = scmp.ne.s32.totalorder %s64, %s66
    %p70 = scmp.eq.s32.totalorder %s9, 0
    %p71 = por %p69, %p70
    %p72 = scmp.ne.s32.totalorder %s64, %s66
    %p73 = scmp.eq.s32.totalorder %s14, 1
    %p74 = por %p72, %p73
    %p75 = scmp.ne.s32.totalorder %s66, %s67
    %p76 = scmp.eq.s32.totalorder %s14, 0
    %p77 = por %p75, %p76
    %p78 = scmp.ne.s32.totalorder %s66, %s67
    %p79 = scmp.eq.s32.totalorder %s15, 1
    %p80 = por %p78, %p79
    %p82 = scmp.ne.s32.totalorder %s67, %s81
    %p83 = scmp.eq.s32.totalorder %s15, 0
    %p84 = por %p82, %p83
    %s85 = ssub.s32 %s9, %s16
    %p86 = scmp.eq.s32.totalorder %s85, 0
    %s88 = sadd.s32 %s87, 1
    %s89 = scalar_select %p86, %s87, %s88
    %p92 = pneg %p86
    %p93 = scmp.eq.s32.totalorder %s9, 1
    %p94 = por %p92, %p93
    %p95 = scmp.ne.s32.totalorder %s87, %s90
    %p96 = scmp.eq.s32.totalorder %s9, 0
    %p97 = por %p95, %p96
    %p98 = scmp.ne.s32.totalorder %s87, %s90
    %p99 = scmp.eq.s32.totalorder %s14, 1
    %p100 = por %p98, %p99
    %p101 = scmp.ne.s32.totalorder %s90, %s91
    %p102 = scmp.eq.s32.totalorder %s14, 0
    %p103 = por %p101, %p102
    %p104 = scmp.ne.s32.totalorder %s90, %s91
    %p105 = scmp.eq.s32.totalorder %s15, 1
    %p106 = por %p104, %p105
    %p108 = scmp.ne.s32.totalorder %s91, %s107
    %p109 = scmp.eq.s32.totalorder %s15, 0
    %p110 = por %p108, %p109
    %p111 = scmp.le.s32.totalorder 1, %s9
    %p112 = scmp.lt.s32.totalorder %s9, 3
    %p113 = pnand %p111, %p112
    %p114 = pneg %p113
    // Predicated region
    $region9: #{_conv_strided.1} parent=5 // pred_check
      _
    $region10: #{_conv_strided.1} parent=5 // pred_check_branch
      %116 = sbr.rel (%p113) target = $region12
    $region11: #{_conv_strided.1} parent=5 // pred_region
      %s117 = ssub.s32 %s9, 1
      // Predicated region
      $region13: #{_conv_strided.1} parent=11 // pred_check
        %p118 = pneg %p56
      $region14: #{_conv_strided.1} parent=11 // pred_check_branch
        %120 = sbr.rel (%p118) target = $region16
      $region15: #{_conv_strided.1} parent=11 // pred_region
        _
      $region16: #{_conv_strided.1} parent=11 // pred_fallthru
        _
      // Predicated region
      $region17: #{_conv_strided.1} parent=11 // pred_check
        %p121 = pneg %p77
      $region18: #{_conv_strided.1} parent=11 // pred_check_branch
        %123 = sbr.rel (%p121) target = $region20
      $region19: #{_conv_strided.1} parent=11 // pred_region
        _
      $region20: #{_conv_strided.1} parent=11 // pred_fallthru
        _
    $region12: #{_conv_strided.1} parent=5 // pred_fallthru
      _
    %p124 = scmp.lt.s32.totalorder %s9, 2
    // Predicated region
    $region21: #{_conv_strided.1} parent=5 // pred_check
      %p125 = pneg %p124
    $region22: #{_conv_strided.1} parent=5 // pred_check_branch
      %127 = sbr.rel (%p125) target = $region24
    $region23: #{_conv_strided.1} parent=5 // pred_region
      // Predicated region
      $region25: #{_conv_strided.1} parent=23 // pred_check
        %p128 = pneg %p29
      $region26: #{_conv_strided.1} parent=23 // pred_check_branch
        %130 = sbr.rel (%p128) target = $region28
      $region27: #{_conv_strided.1} parent=23 // pred_region
        %s131 = smul.u32 64, %s9
        %p132 = scmp.lt.s32.totalorder %s131, 127
        %s133 = scalar_select %p132, %s131, 127
        %s134 = smul.addr %s133, 4
        %s135 = scalar_lea.vmem %s0, %s134
        %s136 = smul.u32 64, %s9
      $region28: #{_conv_strided.1} parent=23 // pred_fallthru
        _
    $region24: #{_conv_strided.1} parent=5 // pred_fallthru
      _
    %p137 = scmp.le.s32.totalorder 1, %s9
    %p138 = scmp.lt.s32.totalorder %s9, 3
    %p139 = pnand %p137, %p138
    %p140 = pneg %p139
    // Predicated region
    $region29: #{_conv_strided.1} parent=5 // pred_check
      _
    $region30: #{_conv_strided.1} parent=5 // pred_check_branch
      %142 = sbr.rel (%p139) target = $region32
    $region31: #{_conv_strided.1} parent=5 // pred_region
      %s143 = ssub.s32 %s9, 1
      %s144 = smul.u32 64, %s14
      %p145 = scmp.lt.s32.totalorder %s144, 127
      %s146 = scalar_select %p145, %s144, 127
      %s147 = smul.addr %s146, 4
      %s148 = scalar_lea.vmem %s0, %s147
      %p149 = pneg %p35
      %p150 = pneg %p32
      %p151 = pneg %p56
      %p152 = pneg %p53
      %p153 = pneg %p77
      %p154 = pneg %p74
      %p155 = pneg %p103
      %p156 = pneg %p100
      %s157 = smul.u32 64, %s14
      %p158 = scmp.lt.s32.totalorder %s157, 127
      %s159 = scalar_select %p158, %s157, 127
      %s160 = smul.addr %s159, 8
      %s161 = scalar_lea.vmem %s3, %s160
      %s162 = smul.u32 64, %s14
      %p163 = scmp.lt.s32.totalorder %s162, 127
      %s164 = scalar_select %p163, %s162, 127
      %s165 = smul.addr %s164, 4
      %s166 = scalar_lea.vmem %s0, %s165
      %s167 = smul.u32 64, %s14
      %s168 = smul.u32 64, %s14
      %p169 = scmp.lt.s32.totalorder %s168, 127
      %s170 = scalar_select %p169, %s168, 127
      %s171 = smul.addr %s170, 8
      %s172 = scalar_lea.vmem %s3, %s171
      %s173 = smul.u32 64, %s14
      %v175 = vld [vmem:[%s166] sm:$0xf]
      %v176 = vld [vmem:[%s166 + $0x4] sm:$0xf]
      %v177 = vld [vmem:[%s166 + $0x8] sm:$0xf]
      %v178 = vld [vmem:[%s166 + $0xc] sm:$0xf]
      %v179 = vld [vmem:[%s166 + $0x10] sm:$0xf]
      %v180 = vld [vmem:[%s166 + $0x14] sm:$0xf]
      %v181 = vld [vmem:[%s166 + $0x18] sm:$0xf]
      %v182 = vld [vmem:[%s166 + $0x1c] sm:$0xf]
      %v183 = vld [vmem:[%s166 + $0x20] sm:$0xf]
      %v184 = vld [vmem:[%s166 + $0x24] sm:$0xf]
      %v185 = vld [vmem:[%s166 + $0x28] sm:$0xf]
      %v186 = vld [vmem:[%s166 + $0x2c] sm:$0xf]
      %v187 = vld [vmem:[%s166 + $0x30] sm:$0xf]
      %v188 = vld [vmem:[%s166 + $0x34] sm:$0xf]
      %v189 = vld [vmem:[%s166 + $0x38] sm:$0xf]
      %v190 = vld [vmem:[%s166 + $0x3c] sm:$0xf]
      %v191 = vld [vmem:[%s166 + $0x40] sm:$0xf]
      %v192 = vld [vmem:[%s166 + $0x44] sm:$0xf]
      %v193 = vld [vmem:[%s166 + $0x48] sm:$0xf]
      %v194 = vld [vmem:[%s166 + $0x4c] sm:$0xf]
      %v195 = vld [vmem:[%s166 + $0x50] sm:$0xf]
      %v196 = vld [vmem:[%s166 + $0x54] sm:$0xf]
      %v197 = vld [vmem:[%s166 + $0x58] sm:$0xf]
      %v198 = vld [vmem:[%s166 + $0x5c] sm:$0xf]
      %v199 = vld [vmem:[%s166 + $0x60] sm:$0xf]
      %v200 = vld [vmem:[%s166 + $0x64] sm:$0xf]
      %v201 = vld [vmem:[%s166 + $0x68] sm:$0xf]
      %v202 = vld [vmem:[%s166 + $0x6c] sm:$0xf]
      %v203 = vld [vmem:[%s166 + $0x70] sm:$0xf]
      %v204 = vld [vmem:[%s166 + $0x74] sm:$0xf]
      %v205 = vld [vmem:[%s166 + $0x78] sm:$0xf]
      %v206 = vld [vmem:[%s166 + $0x7c] sm:$0xf]
      %v207 = vld [vmem:[%s166 + $0x80] sm:$0xf]
      %v208 = vld [vmem:[%s166 + $0x84] sm:$0xf]
      %v209 = vld [vmem:[%s166 + $0x88] sm:$0xf]
      %v210 = vld [vmem:[%s166 + $0x8c] sm:$0xf]
      %v211 = vld [vmem:[%s166 + $0x90] sm:$0xf]
      %v212 = vld [vmem:[%s166 + $0x94] sm:$0xf]
      %v213 = vld [vmem:[%s166 + $0x98] sm:$0xf]
      %v214 = vld [vmem:[%s166 + $0x9c] sm:$0xf]
      %v215 = vld [vmem:[%s166 + $0xa0] sm:$0xf]
      %v216 = vld [vmem:[%s166 + $0xa4] sm:$0xf]
      %v217 = vld [vmem:[%s166 + $0xa8] sm:$0xf]
      %v218 = vld [vmem:[%s166 + $0xac] sm:$0xf]
      %v219 = vld [vmem:[%s166 + $0xb0] sm:$0xf]
      %v220 = vld [vmem:[%s166 + $0xb4] sm:$0xf]
      %v221 = vld [vmem:[%s166 + $0xb8] sm:$0xf]
      %v222 = vld [vmem:[%s166 + $0xbc] sm:$0xf]
      %v223 = vld [vmem:[%s166 + $0xc0] sm:$0xf]
      %v224 = vld [vmem:[%s166 + $0xc4] sm:$0xf]
      %v225 = vld [vmem:[%s166 + $0xc8] sm:$0xf]
      %v226 = vld [vmem:[%s166 + $0xcc] sm:$0xf]
      %v227 = vld [vmem:[%s166 + $0xd0] sm:$0xf]
      %v228 = vld [vmem:[%s166 + $0xd4] sm:$0xf]
      %v229 = vld [vmem:[%s166 + $0xd8] sm:$0xf]
      %v230 = vld [vmem:[%s166 + $0xdc] sm:$0xf]
      %v231 = vld [vmem:[%s166 + $0xe0] sm:$0xf]
      %v232 = vld [vmem:[%s166 + $0xe4] sm:$0xf]
      %v233 = vld [vmem:[%s166 + $0xe8] sm:$0xf]
      %v234 = vld [vmem:[%s166 + $0xec] sm:$0xf]
      %v235 = vld [vmem:[%s166 + $0xf0] sm:$0xf]
      %v236 = vld [vmem:[%s166 + $0xf4] sm:$0xf]
      %v237 = vld [vmem:[%s166 + $0xf8] sm:$0xf]
      %v238 = vld [vmem:[%s166 + $0xfc] sm:$0xf]
      %v239 = vld [vmem:[%s1] sm:$0xf]
      %v240 = vld [vmem:[%s1 + $0x4] sm:$0xf]
      %v241 = vld [vmem:[%s1 + $0x8] sm:$0xf]
      %v242 = vld [vmem:[%s1 + $0xc] sm:$0x3]
      %v243 = vld [vmem:[%s2] sm:$0x1]
      %v245 = vperm.slane %v243, 0
      %v311 = vunpack.c.l.b16 %v175
      %v312 = vunpack.c.l.b16 %v176
      %v313 = vunpack.c.l.b16 %v177
      %v314 = vunpack.c.l.b16 %v178
      %v315 = vunpack.c.l.b16 %v179
      %v316 = vunpack.c.l.b16 %v180
      %v317 = vunpack.c.l.b16 %v181
      %v318 = vunpack.c.l.b16 %v182
      %v319 = vunpack.c.l.b16 %v183
      %v320 = vunpack.c.l.b16 %v184
      %v321 = vunpack.c.l.b16 %v185
      %v322 = vunpack.c.l.b16 %v186
      %v323 = vunpack.c.l.b16 %v187
      %v324 = vunpack.c.l.b16 %v188
      %v325 = vunpack.c.l.b16 %v189
      %v326 = vunpack.c.l.b16 %v190
      %v327 = vunpack.c.l.b16 %v191
      %v328 = vunpack.c.l.b16 %v192
      %v329 = vunpack.c.l.b16 %v193
      %v330 = vunpack.c.l.b16 %v194
      %v331 = vunpack.c.l.b16 %v195
      %v332 = vunpack.c.l.b16 %v196
      %v333 = vunpack.c.l.b16 %v197
      %v334 = vunpack.c.l.b16 %v198
      %v335 = vunpack.c.l.b16 %v199
      %v336 = vunpack.c.l.b16 %v200
      %v337 = vunpack.c.l.b16 %v201
      %v338 = vunpack.c.l.b16 %v202
      %v339 = vunpack.c.l.b16 %v203
      %v340 = vunpack.c.l.b16 %v204
      %v341 = vunpack.c.l.b16 %v205
      %v342 = vunpack.c.l.b16 %v206
      %v343 = vunpack.c.l.b16 %v207
      %v344 = vunpack.c.l.b16 %v208
      %v345 = vunpack.c.l.b16 %v209
      %v346 = vunpack.c.l.b16 %v210
      %v347 = vunpack.c.l.b16 %v211
      %v348 = vunpack.c.l.b16 %v212
      %v349 = vunpack.c.l.b16 %v213
      %v350 = vunpack.c.l.b16 %v214
      %v351 = vunpack.c.l.b16 %v215
      %v352 = vunpack.c.l.b16 %v216
      %v353 = vunpack.c.l.b16 %v217
      %v354 = vunpack.c.l.b16 %v218
      %v355 = vunpack.c.l.b16 %v219
      %v356 = vunpack.c.l.b16 %v220
      %v357 = vunpack.c.l.b16 %v221
      %v358 = vunpack.c.l.b16 %v222
      %v359 = vunpack.c.l.b16 %v223
      %v360 = vunpack.c.l.b16 %v224
      %v361 = vunpack.c.l.b16 %v225
      %v362 = vunpack.c.l.b16 %v226
      %v363 = vunpack.c.l.b16 %v227
      %v364 = vunpack.c.l.b16 %v228
      %v365 = vunpack.c.l.b16 %v229
      %v366 = vunpack.c.l.b16 %v230
      %v367 = vunpack.c.l.b16 %v231
      %v368 = vunpack.c.l.b16 %v232
      %v369 = vunpack.c.l.b16 %v233
      %v370 = vunpack.c.l.b16 %v234
      %v371 = vunpack.c.l.b16 %v235
      %v372 = vunpack.c.l.b16 %v236
      %v373 = vunpack.c.l.b16 %v237
      %v374 = vunpack.c.l.b16 %v238
      %v375 = vpack.c.b16 %v312, %v311
      %v376 = vpack.c.b16 %v314, %v313
      %v377 = vpack.c.b16 %v316, %v315
      %v378 = vpack.c.b16 %v318, %v317
      %v379 = vpack.c.b16 %v320, %v319
      %v380 = vpack.c.b16 %v322, %v321
      %v381 = vpack.c.b16 %v324, %v323
      %v382 = vpack.c.b16 %v326, %v325
      %v383 = vpack.c.b16 %v328, %v327
      %v384 = vpack.c.b16 %v330, %v329
      %v385 = vpack.c.b16 %v332, %v331
      %v386 = vpack.c.b16 %v334, %v333
      %v387 = vpack.c.b16 %v336, %v335
      %v388 = vpack.c.b16 %v338, %v337
      %v389 = vpack.c.b16 %v340, %v339
      %v390 = vpack.c.b16 %v342, %v341
      %v391 = vpack.c.b16 %v344, %v343
      %v392 = vpack.c.b16 %v346, %v345
      %v393 = vpack.c.b16 %v348, %v347
      %v394 = vpack.c.b16 %v350, %v349
      %v395 = vpack.c.b16 %v352, %v351
      %v396 = vpack.c.b16 %v354, %v353
      %v397 = vpack.c.b16 %v356, %v355
      %v398 = vpack.c.b16 %v358, %v357
      %v399 = vpack.c.b16 %v360, %v359
      %v400 = vpack.c.b16 %v362, %v361
      %v401 = vpack.c.b16 %v364, %v363
      %v402 = vpack.c.b16 %v366, %v365
      %v403 = vpack.c.b16 %v368, %v367
      %v404 = vpack.c.b16 %v370, %v369
      %v405 = vpack.c.b16 %v372, %v371
      %v406 = vpack.c.b16 %v374, %v373
      %v411 = vunpack.c.l.b16 %v239
      %v412 = vunpack.c.l.b16 %v240
      %v413 = vunpack.c.l.b16 %v241
      %v414 = vunpack.c.l.b16 %v242
      %v415 = vpack.c.b16 %v412, %v411
      %v416 = vpack.c.b16 %v414, %v413
      %vm418 = vcmask 220160
      %v420 = vsel %vm418, %v375, 0
      %v423 = vsel %vm418, %v376, 0
      %v426 = vsel %vm418, %v377, 0
      %v429 = vsel %vm418, %v378, 0
      %v432 = vsel %vm418, %v379, 0
      %v435 = vsel %vm418, %v380, 0
      %v438 = vsel %vm418, %v381, 0
      %v441 = vsel %vm418, %v382, 0
      %v444 = vsel %vm418, %v383, 0
      %v447 = vsel %vm418, %v384, 0
      %v450 = vsel %vm418, %v385, 0
      %v453 = vsel %vm418, %v386, 0
      %v456 = vsel %vm418, %v387, 0
      %v459 = vsel %vm418, %v388, 0
      %v462 = vsel %vm418, %v389, 0
      %v465 = vsel %vm418, %v390, 0
      %v468 = vsel %vm418, %v391, 0
      %v471 = vsel %vm418, %v392, 0
      %v474 = vsel %vm418, %v393, 0
      %v477 = vsel %vm418, %v394, 0
      %v480 = vsel %vm418, %v395, 0
      %v483 = vsel %vm418, %v396, 0
      %v486 = vsel %vm418, %v397, 0
      %v489 = vsel %vm418, %v398, 0
      %v492 = vsel %vm418, %v399, 0
      %v495 = vsel %vm418, %v400, 0
      %v498 = vsel %vm418, %v401, 0
      %v501 = vsel %vm418, %v402, 0
      %v504 = vsel %vm418, %v403, 0
      %v507 = vsel %vm418, %v404, 0
      %v510 = vsel %vm418, %v405, 0
      %v513 = vsel %vm418, %v406, 0
      %vm515 = vcmask 1044480
      %vm516 = vcmask 1045504
      %v517 = vsel %vm515, 4294967295, 65535
      %v518 = vsel %vm516, %v517, 0
      %v520 = vand.u32 %v416, %v518
      %522 = vmatpush.bf16.msra.mxu0 0
      %523 = vmatpush.bf16.msra.mxu0 0
      %524 = vmatpush.bf16.msra.mxu0 0
      %525 = vmatpush.bf16.msra.mxu0 0
      %526 = vmatpush.bf16.msra.mxu0 0
      %527 = vmatpush.bf16.msra.mxu0 0
      %528 = vmatpush.bf16.msra.mxu0 %v520
      %529 = vmatpush.bf16.msra.mxu0 %v415
      %530 = vmatmul.bf16.gmra.mxu0 %v420
      %v531 = vpop.f32.mrf.mxu0
      %v532 = vadd.f32 %v245, %v531
      %v533 = vpop.f32.mrf.mxu0
      %v534 = vadd.f32 %v245, %v533
      %535 = vmatmul.bf16.gmra.mxu0 %v423
      %v536 = vpop.f32.mrf.mxu0
      %v537 = vadd.f32 %v245, %v536
      %v538 = vpop.f32.mrf.mxu0
      %v539 = vadd.f32 %v245, %v538
      %540 = vmatmul.bf16.gmra.mxu0 %v426
      %v541 = vpop.f32.mrf.mxu0
      %v542 = vadd.f32 %v245, %v541
      %v543 = vpop.f32.mrf.mxu0
      %v544 = vadd.f32 %v245, %v543
      %545 = vmatmul.bf16.gmra.mxu0 %v429
      %v546 = vpop.f32.mrf.mxu0
      %v547 = vadd.f32 %v245, %v546
      %v548 = vpop.f32.mrf.mxu0
      %v549 = vadd.f32 %v245, %v548
      %550 = vmatmul.bf16.gmra.mxu0 %v432
      %v551 = vpop.f32.mrf.mxu0
      %v552 = vadd.f32 %v245, %v551
      %v553 = vpop.f32.mrf.mxu0
      %v554 = vadd.f32 %v245, %v553
      %555 = vmatmul.bf16.gmra.mxu0 %v435
      %v556 = vpop.f32.mrf.mxu0
      %v557 = vadd.f32 %v245, %v556
      %v558 = vpop.f32.mrf.mxu0
      %v559 = vadd.f32 %v245, %v558
      %560 = vmatmul.bf16.gmra.mxu0 %v438
      %v561 = vpop.f32.mrf.mxu0
      %v562 = vadd.f32 %v245, %v561
      %v563 = vpop.f32.mrf.mxu0
      %v564 = vadd.f32 %v245, %v563
      %565 = vmatmul.bf16.gmra.mxu0 %v441
      %v566 = vpop.f32.mrf.mxu0
      %v567 = vadd.f32 %v245, %v566
      %v568 = vpop.f32.mrf.mxu0
      %v569 = vadd.f32 %v245, %v568
      %570 = vmatmul.bf16.gmra.mxu0 %v444
      %v571 = vpop.f32.mrf.mxu0
      %v572 = vadd.f32 %v245, %v571
      %v573 = vpop.f32.mrf.mxu0
      %v574 = vadd.f32 %v245, %v573
      %575 = vmatmul.bf16.gmra.mxu0 %v447
      %v576 = vpop.f32.mrf.mxu0
      %v577 = vadd.f32 %v245, %v576
      %v578 = vpop.f32.mrf.mxu0
      %v579 = vadd.f32 %v245, %v578
      %580 = vmatmul.bf16.gmra.mxu0 %v450
      %v581 = vpop.f32.mrf.mxu0
      %v582 = vadd.f32 %v245, %v581
      %v583 = vpop.f32.mrf.mxu0
      %v584 = vadd.f32 %v245, %v583
      %585 = vmatmul.bf16.gmra.mxu0 %v453
      %v586 = vpop.f32.mrf.mxu0
      %v587 = vadd.f32 %v245, %v586
      %v588 = vpop.f32.mrf.mxu0
      %v589 = vadd.f32 %v245, %v588
      %590 = vmatmul.bf16.gmra.mxu0 %v456
      %v591 = vpop.f32.mrf.mxu0
      %v592 = vadd.f32 %v245, %v591
      %v593 = vpop.f32.mrf.mxu0
      %v594 = vadd.f32 %v245, %v593
      %595 = vmatmul.bf16.gmra.mxu0 %v459
      %v596 = vpop.f32.mrf.mxu0
      %v597 = vadd.f32 %v245, %v596
      %v598 = vpop.f32.mrf.mxu0
      %v599 = vadd.f32 %v245, %v598
      %600 = vmatmul.bf16.gmra.mxu0 %v462
      %v601 = vpop.f32.mrf.mxu0
      %v602 = vadd.f32 %v245, %v601
      %v603 = vpop.f32.mrf.mxu0
      %v604 = vadd.f32 %v245, %v603
      %605 = vmatmul.bf16.gmra.mxu0 %v465
      %v606 = vpop.f32.mrf.mxu0
      %v607 = vadd.f32 %v245, %v606
      %v608 = vpop.f32.mrf.mxu0
      %v609 = vadd.f32 %v245, %v608
      %610 = vmatmul.bf16.gmra.mxu0 %v468
      %v611 = vpop.f32.mrf.mxu0
      %v612 = vadd.f32 %v245, %v611
      %v613 = vpop.f32.mrf.mxu0
      %v614 = vadd.f32 %v245, %v613
      %615 = vmatmul.bf16.gmra.mxu0 %v471
      %v616 = vpop.f32.mrf.mxu0
      %v617 = vadd.f32 %v245, %v616
      %v618 = vpop.f32.mrf.mxu0
      %v619 = vadd.f32 %v245, %v618
      %620 = vmatmul.bf16.gmra.mxu0 %v474
      %v621 = vpop.f32.mrf.mxu0
      %v622 = vadd.f32 %v245, %v621
      %v623 = vpop.f32.mrf.mxu0
      %v624 = vadd.f32 %v245, %v623
      %625 = vmatmul.bf16.gmra.mxu0 %v477
      %v626 = vpop.f32.mrf.mxu0
      %v627 = vadd.f32 %v245, %v626
      %v628 = vpop.f32.mrf.mxu0
      %v629 = vadd.f32 %v245, %v628
      %630 = vmatmul.bf16.gmra.mxu0 %v480
      %v631 = vpop.f32.mrf.mxu0
      %v632 = vadd.f32 %v245, %v631
      %v633 = vpop.f32.mrf.mxu0
      %v634 = vadd.f32 %v245, %v633
      %635 = vmatmul.bf16.gmra.mxu0 %v483
      %v636 = vpop.f32.mrf.mxu0
      %v637 = vadd.f32 %v245, %v636
      %v638 = vpop.f32.mrf.mxu0
      %v639 = vadd.f32 %v245, %v638
      %640 = vmatmul.bf16.gmra.mxu0 %v486
      %v641 = vpop.f32.mrf.mxu0
      %v642 = vadd.f32 %v245, %v641
      %v643 = vpop.f32.mrf.mxu0
      %v644 = vadd.f32 %v245, %v643
      %645 = vmatmul.bf16.gmra.mxu0 %v489
      %v646 = vpop.f32.mrf.mxu0
      %v647 = vadd.f32 %v245, %v646
      %v648 = vpop.f32.mrf.mxu0
      %v649 = vadd.f32 %v245, %v648
      %650 = vmatmul.bf16.gmra.mxu0 %v492
      %v651 = vpop.f32.mrf.mxu0
      %v652 = vadd.f32 %v245, %v651
      %v653 = vpop.f32.mrf.mxu0
      %v654 = vadd.f32 %v245, %v653
      %655 = vmatmul.bf16.gmra.mxu0 %v495
      %v656 = vpop.f32.mrf.mxu0
      %v657 = vadd.f32 %v245, %v656
      %v658 = vpop.f32.mrf.mxu0
      %v659 = vadd.f32 %v245, %v658
      %660 = vmatmul.bf16.gmra.mxu0 %v498
      %v661 = vpop.f32.mrf.mxu0
      %v662 = vadd.f32 %v245, %v661
      %v663 = vpop.f32.mrf.mxu0
      %v664 = vadd.f32 %v245, %v663
      %665 = vmatmul.bf16.gmra.mxu0 %v501
      %v666 = vpop.f32.mrf.mxu0
      %v667 = vadd.f32 %v245, %v666
      %v668 = vpop.f32.mrf.mxu0
      %v669 = vadd.f32 %v245, %v668
      %670 = vmatmul.bf16.gmra.mxu0 %v504
      %v671 = vpop.f32.mrf.mxu0
      %v672 = vadd.f32 %v245, %v671
      %v673 = vpop.f32.mrf.mxu0
      %v674 = vadd.f32 %v245, %v673
      %675 = vmatmul.bf16.gmra.mxu0 %v507
      %v676 = vpop.f32.mrf.mxu0
      %v677 = vadd.f32 %v245, %v676
      %v678 = vpop.f32.mrf.mxu0
      %v679 = vadd.f32 %v245, %v678
      %680 = vmatmul.bf16.gmra.mxu0 %v510
      %v681 = vpop.f32.mrf.mxu0
      %v682 = vadd.f32 %v245, %v681
      %v683 = vpop.f32.mrf.mxu0
      %v684 = vadd.f32 %v245, %v683
      %685 = vmatmul.bf16.gmra.mxu0 %v513
      %v686 = vpop.f32.mrf.mxu0
      %v687 = vadd.f32 %v245, %v686
      %v688 = vpop.f32.mrf.mxu0
      %v689 = vadd.f32 %v245, %v688
      %690 = vdwg.mxu0
      %vm691 = vcmp.gt.f32.partialorder %v532, 0.0
      %vm692 = vcmp.gt.f32.partialorder %v534, 0.0
      %vm693 = vcmp.gt.f32.partialorder %v537, 0.0
      %vm694 = vcmp.gt.f32.partialorder %v539, 0.0
      %vm695 = vcmp.gt.f32.partialorder %v542, 0.0
      %vm696 = vcmp.gt.f32.partialorder %v544, 0.0
      %vm697 = vcmp.gt.f32.partialorder %v547, 0.0
      %vm698 = vcmp.gt.f32.partialorder %v549, 0.0
      %vm699 = vcmp.gt.f32.partialorder %v552, 0.0
      %vm700 = vcmp.gt.f32.partialorder %v554, 0.0
      %vm701 = vcmp.gt.f32.partialorder %v557, 0.0
      %vm702 = vcmp.gt.f32.partialorder %v559, 0.0
      %vm703 = vcmp.gt.f32.partialorder %v562, 0.0
      %vm704 = vcmp.gt.f32.partialorder %v564, 0.0
      %vm705 = vcmp.gt.f32.partialorder %v567, 0.0
      %vm706 = vcmp.gt.f32.partialorder %v569, 0.0
      %vm707 = vcmp.gt.f32.partialorder %v572, 0.0
      %vm708 = vcmp.gt.f32.partialorder %v574, 0.0
      %vm709 = vcmp.gt.f32.partialorder %v577, 0.0
      %vm710 = vcmp.gt.f32.partialorder %v579, 0.0
      %vm711 = vcmp.gt.f32.partialorder %v582, 0.0
      %vm712 = vcmp.gt.f32.partialorder %v584, 0.0
      %vm713 = vcmp.gt.f32.partialorder %v587, 0.0
      %vm714 = vcmp.gt.f32.partialorder %v589, 0.0
      %vm715 = vcmp.gt.f32.partialorder %v592, 0.0
      %vm716 = vcmp.gt.f32.partialorder %v594, 0.0
      %vm717 = vcmp.gt.f32.partialorder %v597, 0.0
      %vm718 = vcmp.gt.f32.partialorder %v599, 0.0
      %vm719 = vcmp.gt.f32.partialorder %v602, 0.0
      %vm720 = vcmp.gt.f32.partialorder %v604, 0.0
      %vm721 = vcmp.gt.f32.partialorder %v607, 0.0
      %vm722 = vcmp.gt.f32.partialorder %v609, 0.0
      %vm723 = vcmp.gt.f32.partialorder %v612, 0.0
      %vm724 = vcmp.gt.f32.partialorder %v614, 0.0
      %vm725 = vcmp.gt.f32.partialorder %v617, 0.0
      %vm726 = vcmp.gt.f32.partialorder %v619, 0.0
      %vm727 = vcmp.gt.f32.partialorder %v622, 0.0
      %vm728 = vcmp.gt.f32.partialorder %v624, 0.0
      %vm729 = vcmp.gt.f32.partialorder %v627, 0.0
      %vm730 = vcmp.gt.f32.partialorder %v629, 0.0
      %vm731 = vcmp.gt.f32.partialorder %v632, 0.0
      %vm732 = vcmp.gt.f32.partialorder %v634, 0.0
      %vm733 = vcmp.gt.f32.partialorder %v637, 0.0
      %vm734 = vcmp.gt.f32.partialorder %v639, 0.0
      %vm735 = vcmp.gt.f32.partialorder %v642, 0.0
      %vm736 = vcmp.gt.f32.partialorder %v644, 0.0
      %vm737 = vcmp.gt.f32.partialorder %v647, 0.0
      %vm738 = vcmp.gt.f32.partialorder %v649, 0.0
      %vm739 = vcmp.gt.f32.partialorder %v652, 0.0
      %vm740 = vcmp.gt.f32.partialorder %v654, 0.0
      %vm741 = vcmp.gt.f32.partialorder %v657, 0.0
      %vm742 = vcmp.gt.f32.partialorder %v659, 0.0
      %vm743 = vcmp.gt.f32.partialorder %v662, 0.0
      %vm744 = vcmp.gt.f32.partialorder %v664, 0.0
      %vm745 = vcmp.gt.f32.partialorder %v667, 0.0
      %vm746 = vcmp.gt.f32.partialorder %v669, 0.0
      %vm747 = vcmp.gt.f32.partialorder %v672, 0.0
      %vm748 = vcmp.gt.f32.partialorder %v674, 0.0
      %vm749 = vcmp.gt.f32.partialorder %v677, 0.0
      %vm750 = vcmp.gt.f32.partialorder %v679, 0.0
      %vm751 = vcmp.gt.f32.partialorder %v682, 0.0
      %vm752 = vcmp.gt.f32.partialorder %v684, 0.0
      %vm753 = vcmp.gt.f32.partialorder %v687, 0.0
      %vm754 = vcmp.gt.f32.partialorder %v689, 0.0
      %v755 = vmul.f32 %v532, 0.1
      %v756 = vmul.f32 %v534, 0.1
      %v757 = vmul.f32 %v537, 0.1
      %v758 = vmul.f32 %v539, 0.1
      %v759 = vmul.f32 %v542, 0.1
      %v760 = vmul.f32 %v544, 0.1
      %v761 = vmul.f32 %v547, 0.1
      %v762 = vmul.f32 %v549, 0.1
      %v763 = vmul.f32 %v552, 0.1
      %v764 = vmul.f32 %v554, 0.1
      %v765 = vmul.f32 %v557, 0.1
      %v766 = vmul.f32 %v559, 0.1
      %v767 = vmul.f32 %v562, 0.1
      %v768 = vmul.f32 %v564, 0.1
      %v769 = vmul.f32 %v567, 0.1
      %v770 = vmul.f32 %v569, 0.1
      %v771 = vmul.f32 %v572, 0.1
      %v772 = vmul.f32 %v574, 0.1
      %v773 = vmul.f32 %v577, 0.1
      %v774 = vmul.f32 %v579, 0.1
      %v775 = vmul.f32 %v582, 0.1
      %v776 = vmul.f32 %v584, 0.1
      %v777 = vmul.f32 %v587, 0.1
      %v778 = vmul.f32 %v589, 0.1
      %v779 = vmul.f32 %v592, 0.1
      %v780 = vmul.f32 %v594, 0.1
      %v781 = vmul.f32 %v597, 0.1
      %v782 = vmul.f32 %v599, 0.1
      %v783 = vmul.f32 %v602, 0.1
      %v784 = vmul.f32 %v604, 0.1
      %v785 = vmul.f32 %v607, 0.1
      %v786 = vmul.f32 %v609, 0.1
      %v787 = vmul.f32 %v612, 0.1
      %v788 = vmul.f32 %v614, 0.1
      %v789 = vmul.f32 %v617, 0.1
      %v790 = vmul.f32 %v619, 0.1
      %v791 = vmul.f32 %v622, 0.1
      %v792 = vmul.f32 %v624, 0.1
      %v793 = vmul.f32 %v627, 0.1
      %v794 = vmul.f32 %v629, 0.1
      %v795 = vmul.f32 %v632, 0.1
      %v796 = vmul.f32 %v634, 0.1
      %v797 = vmul.f32 %v637, 0.1
      %v798 = vmul.f32 %v639, 0.1
      %v799 = vmul.f32 %v642, 0.1
      %v800 = vmul.f32 %v644, 0.1
      %v801 = vmul.f32 %v647, 0.1
      %v802 = vmul.f32 %v649, 0.1
      %v803 = vmul.f32 %v652, 0.1
      %v804 = vmul.f32 %v654, 0.1
      %v805 = vmul.f32 %v657, 0.1
      %v806 = vmul.f32 %v659, 0.1
      %v807 = vmul.f32 %v662, 0.1
      %v808 = vmul.f32 %v664, 0.1
      %v809 = vmul.f32 %v667, 0.1
      %v810 = vmul.f32 %v669, 0.1
      %v811 = vmul.f32 %v672, 0.1
      %v812 = vmul.f32 %v674, 0.1
      %v813 = vmul.f32 %v677, 0.1
      %v814 = vmul.f32 %v679, 0.1
      %v815 = vmul.f32 %v682, 0.1
      %v816 = vmul.f32 %v684, 0.1
      %v817 = vmul.f32 %v687, 0.1
      %v818 = vmul.f32 %v689, 0.1
      %v819 = vsel %vm691, %v532, %v755
      %v820 = vsel %vm692, %v534, %v756
      %v821 = vsel %vm693, %v537, %v757
      %v822 = vsel %vm694, %v539, %v758
      %v823 = vsel %vm695, %v542, %v759
      %v824 = vsel %vm696, %v544, %v760
      %v825 = vsel %vm697, %v547, %v761
      %v826 = vsel %vm698, %v549, %v762
      %v827 = vsel %vm699, %v552, %v763
      %v828 = vsel %vm700, %v554, %v764
      %v829 = vsel %vm701, %v557, %v765
      %v830 = vsel %vm702, %v559, %v766
      %v831 = vsel %vm703, %v562, %v767
      %v832 = vsel %vm704, %v564, %v768
      %v833 = vsel %vm705, %v567, %v769
      %v834 = vsel %vm706, %v569, %v770
      %v835 = vsel %vm707, %v572, %v771
      %v836 = vsel %vm708, %v574, %v772
      %v837 = vsel %vm709, %v577, %v773
      %v838 = vsel %vm710, %v579, %v774
      %v839 = vsel %vm711, %v582, %v775
      %v840 = vsel %vm712, %v584, %v776
      %v841 = vsel %vm713, %v587, %v777
      %v842 = vsel %vm714, %v589, %v778
      %v843 = vsel %vm715, %v592, %v779
      %v844 = vsel %vm716, %v594, %v780
      %v845 = vsel %vm717, %v597, %v781
      %v846 = vsel %vm718, %v599, %v782
      %v847 = vsel %vm719, %v602, %v783
      %v848 = vsel %vm720, %v604, %v784
      %v849 = vsel %vm721, %v607, %v785
      %v850 = vsel %vm722, %v609, %v786
      %v851 = vsel %vm723, %v612, %v787
      %v852 = vsel %vm724, %v614, %v788
      %v853 = vsel %vm725, %v617, %v789
      %v854 = vsel %vm726, %v619, %v790
      %v855 = vsel %vm727, %v622, %v791
      %v856 = vsel %vm728, %v624, %v792
      %v857 = vsel %vm729, %v627, %v793
      %v858 = vsel %vm730, %v629, %v794
      %v859 = vsel %vm731, %v632, %v795
      %v860 = vsel %vm732, %v634, %v796
      %v861 = vsel %vm733, %v637, %v797
      %v862 = vsel %vm734, %v639, %v798
      %v863 = vsel %vm735, %v642, %v799
      %v864 = vsel %vm736, %v644, %v800
      %v865 = vsel %vm737, %v647, %v801
      %v866 = vsel %vm738, %v649, %v802
      %v867 = vsel %vm739, %v652, %v803
      %v868 = vsel %vm740, %v654, %v804
      %v869 = vsel %vm741, %v657, %v805
      %v870 = vsel %vm742, %v659, %v806
      %v871 = vsel %vm743, %v662, %v807
      %v872 = vsel %vm744, %v664, %v808
      %v873 = vsel %vm745, %v667, %v809
      %v874 = vsel %vm746, %v669, %v810
      %v875 = vsel %vm747, %v672, %v811
      %v876 = vsel %vm748, %v674, %v812
      %v877 = vsel %vm749, %v677, %v813
      %v878 = vsel %vm750, %v679, %v814
      %v879 = vsel %vm751, %v682, %v815
      %v880 = vsel %vm752, %v684, %v816
      %v881 = vsel %vm753, %v687, %v817
      %v882 = vsel %vm754, %v689, %v818
      %vm883 = vcmask 130048
      %884 = vst.msk [vmem:[%s172] sm:$0xff] %vm883, %v819
      %885 = vst.msk [vmem:[%s172 + $0x8] sm:$0xff] %vm883, %v820
      %886 = vst.msk [vmem:[%s172 + $0x10] sm:$0xff] %vm883, %v821
      %887 = vst.msk [vmem:[%s172 + $0x18] sm:$0xff] %vm883, %v822
      %888 = vst.msk [vmem:[%s172 + $0x20] sm:$0xff] %vm883, %v823
      %889 = vst.msk [vmem:[%s172 + $0x28] sm:$0xff] %vm883, %v824
      %890 = vst.msk [vmem:[%s172 + $0x30] sm:$0xff] %vm883, %v825
      %891 = vst.msk [vmem:[%s172 + $0x38] sm:$0xff] %vm883, %v826
      %892 = vst.msk [vmem:[%s172 + $0x40] sm:$0xff] %vm883, %v827
      %893 = vst.msk [vmem:[%s172 + $0x48] sm:$0xff] %vm883, %v828
      %894 = vst.msk [vmem:[%s172 + $0x50] sm:$0xff] %vm883, %v829
      %895 = vst.msk [vmem:[%s172 + $0x58] sm:$0xff] %vm883, %v830
      %896 = vst.msk [vmem:[%s172 + $0x60] sm:$0xff] %vm883, %v831
      %897 = vst.msk [vmem:[%s172 + $0x68] sm:$0xff] %vm883, %v832
      %898 = vst.msk [vmem:[%s172 + $0x70] sm:$0xff] %vm883, %v833
      %899 = vst.msk [vmem:[%s172 + $0x78] sm:$0xff] %vm883, %v834
      %900 = vst.msk [vmem:[%s172 + $0x80] sm:$0xff] %vm883, %v835
      %901 = vst.msk [vmem:[%s172 + $0x88] sm:$0xff] %vm883, %v836
      %902 = vst.msk [vmem:[%s172 + $0x90] sm:$0xff] %vm883, %v837
      %903 = vst.msk [vmem:[%s172 + $0x98] sm:$0xff] %vm883, %v838
      %904 = vst.msk [vmem:[%s172 + $0xa0] sm:$0xff] %vm883, %v839
      %905 = vst.msk [vmem:[%s172 + $0xa8] sm:$0xff] %vm883, %v840
      %906 = vst.msk [vmem:[%s172 + $0xb0] sm:$0xff] %vm883, %v841
      %907 = vst.msk [vmem:[%s172 + $0xb8] sm:$0xff] %vm883, %v842
      %908 = vst.msk [vmem:[%s172 + $0xc0] sm:$0xff] %vm883, %v843
      %909 = vst.msk [vmem:[%s172 + $0xc8] sm:$0xff] %vm883, %v844
      %910 = vst.msk [vmem:[%s172 + $0xd0] sm:$0xff] %vm883, %v845
      %911 = vst.msk [vmem:[%s172 + $0xd8] sm:$0xff] %vm883, %v846
      %912 = vst.msk [vmem:[%s172 + $0xe0] sm:$0xff] %vm883, %v847
      %913 = vst.msk [vmem:[%s172 + $0xe8] sm:$0xff] %vm883, %v848
      %914 = vst.msk [vmem:[%s172 + $0xf0] sm:$0xff] %vm883, %v849
      %915 = vst.msk [vmem:[%s172 + $0xf8] sm:$0xff] %vm883, %v850
      %916 = vst.msk [vmem:[%s172 + $0x100] sm:$0xff] %vm883, %v851
      %917 = vst.msk [vmem:[%s172 + $0x108] sm:$0xff] %vm883, %v852
      %918 = vst.msk [vmem:[%s172 + $0x110] sm:$0xff] %vm883, %v853
      %919 = vst.msk [vmem:[%s172 + $0x118] sm:$0xff] %vm883, %v854
      %920 = vst.msk [vmem:[%s172 + $0x120] sm:$0xff] %vm883, %v855
      %921 = vst.msk [vmem:[%s172 + $0x128] sm:$0xff] %vm883, %v856
      %922 = vst.msk [vmem:[%s172 + $0x130] sm:$0xff] %vm883, %v857
      %923 = vst.msk [vmem:[%s172 + $0x138] sm:$0xff] %vm883, %v858
      %924 = vst.msk [vmem:[%s172 + $0x140] sm:$0xff] %vm883, %v859
      %925 = vst.msk [vmem:[%s172 + $0x148] sm:$0xff] %vm883, %v860
      %926 = vst.msk [vmem:[%s172 + $0x150] sm:$0xff] %vm883, %v861
      %927 = vst.msk [vmem:[%s172 + $0x158] sm:$0xff] %vm883, %v862
      %928 = vst.msk [vmem:[%s172 + $0x160] sm:$0xff] %vm883, %v863
      %929 = vst.msk [vmem:[%s172 + $0x168] sm:$0xff] %vm883, %v864
      %930 = vst.msk [vmem:[%s172 + $0x170] sm:$0xff] %vm883, %v865
      %931 = vst.msk [vmem:[%s172 + $0x178] sm:$0xff] %vm883, %v866
      %932 = vst.msk [vmem:[%s172 + $0x180] sm:$0xff] %vm883, %v867
      %933 = vst.msk [vmem:[%s172 + $0x188] sm:$0xff] %vm883, %v868
      %934 = vst.msk [vmem:[%s172 + $0x190] sm:$0xff] %vm883, %v869
      %935 = vst.msk [vmem:[%s172 + $0x198] sm:$0xff] %vm883, %v870
      %936 = vst.msk [vmem:[%s172 + $0x1a0] sm:$0xff] %vm883, %v871
      %937 = vst.msk [vmem:[%s172 + $0x1a8] sm:$0xff] %vm883, %v872
      %938 = vst.msk [vmem:[%s172 + $0x1b0] sm:$0xff] %vm883, %v873
      %939 = vst.msk [vmem:[%s172 + $0x1b8] sm:$0xff] %vm883, %v874
      %940 = vst.msk [vmem:[%s172 + $0x1c0] sm:$0xff] %vm883, %v875
      %941 = vst.msk [vmem:[%s172 + $0x1c8] sm:$0xff] %vm883, %v876
      %942 = vst.msk [vmem:[%s172 + $0x1d0] sm:$0xff] %vm883, %v877
      %943 = vst.msk [vmem:[%s172 + $0x1d8] sm:$0xff] %vm883, %v878
      %944 = vst.msk [vmem:[%s172 + $0x1e0] sm:$0xff] %vm883, %v879
      %945 = vst.msk [vmem:[%s172 + $0x1e8] sm:$0xff] %vm883, %v880
      %946 = vst.msk [vmem:[%s172 + $0x1f0] sm:$0xff] %vm883, %v881
      %947 = vst.msk [vmem:[%s172 + $0x1f8] sm:$0xff] %vm883, %v882
      %s948 = smul.u32 64, %s14
      %p949 = scmp.lt.s32.totalorder %s948, 127
      %s950 = scalar_select %p949, %s948, 127
      %s951 = smul.addr %s950, 8
      %s952 = scalar_lea.vmem %s3, %s951
      // Predicated region
      $region33: #{_conv_strided.1} parent=31 // pred_check
        %p953 = pneg %p100
      $region34: #{_conv_strided.1} parent=31 // pred_check_branch
        %955 = sbr.rel (%p953) target = $region36
      $region35: #{_conv_strided.1} parent=31 // pred_region
        %s956 = smul.u32 64, %s14
      $region36: #{_conv_strided.1} parent=31 // pred_fallthru
        _
    $region32: #{_conv_strided.1} parent=5 // pred_fallthru
      _
    %p957 = scmp.le.s32.totalorder 2, %s9
    // Predicated region
    $region37: #{_conv_strided.1} parent=5 // pred_check
      %p958 = pneg %p957
    $region38: #{_conv_strided.1} parent=5 // pred_check_branch
      %960 = sbr.rel (%p958) target = $region40
    $region39: #{_conv_strided.1} parent=5 // pred_region
      %s961 = ssub.s32 %s9, 2
      // Predicated region
      $region41: #{_conv_strided.1} parent=39 // pred_check
        %p962 = pneg %p106
      $region42: #{_conv_strided.1} parent=39 // pred_check_branch
        %964 = sbr.rel (%p962) target = $region44
      $region43: #{_conv_strided.1} parent=39 // pred_region
        %s965 = smul.u32 64, %s15
        %p966 = scmp.lt.s32.totalorder %s965, 127
        %s967 = scalar_select %p966, %s965, 127
        %s968 = smul.addr %s967, 8
        %s969 = scalar_lea.vmem %s3, %s968
      $region44: #{_conv_strided.1} parent=39 // pred_fallthru
        _
    $region40: #{_conv_strided.1} parent=5 // pred_fallthru
      _
  $region6: #{_conv_strided.1} parent=0 // loop_footer
    %s13 = sadd.s32 1, %s9
  $region7: #{_conv_strided.1} parent=0 // loop_footer_branch
    %8 = sbr.rel target = $region3
  $region8: #{_conv_strided.1} parent=0 // loop_exit
    _

</llo_original>
